<compile_context>
chip_gen: v7x
topology: tpu7x:2x2x1
jax: 0.10.0
libtpu: 0.0.40
codegen_flags: <defaults>
</compile_context>

<pallas_src>
import functools

import jax
import jax.numpy as jnp
from jax import lax
from jax.experimental import pallas as pl
from jax.experimental.pallas import tpu as pltpu

NEG_LARGE = -1e30  # finite "-inf": keeps fully-padded tiles NaN-free


def _round_up(x, m):
    return ((x + m - 1) // m) * m


def _batch_tile(B, S, H, budget_bytes=8 * 1024 * 1024):
    """Largest batch tile that divides B, keeps the f32 (tb,S,H) item block
    under `budget_bytes`, and is sublane-aligned (tb % 8 == 0) unless tb==B."""
    cap = max(1, budget_bytes // (4 * S * H))
    if B <= cap:
        return B
    for tb in range(min(B, cap), 0, -1):
        if B % tb == 0 and (tb % 8 == 0 or tb == B):
            return tb
    return B


# --------------------------------------------------------------------------
# Kernel 1: per-group user-embedding extraction
# --------------------------------------------------------------------------
def _user_emb_kernel(item_ref, cate_ref, wt_ref, out_ref):
    item = item_ref[...].astype(jnp.float32)          # (tb, S, H)
    cate_g = cate_ref[0].astype(jnp.float32)          # (tb, H)
    wt = wt_ref[...].astype(jnp.float32)              # (H_in, H_out) = W^T

    prod = item * cate_g[:, None, :]                  # (tb, S, H)
    m = jnp.max(prod, axis=1, keepdims=True)
    e = jnp.exp(prod - m)
    # Fused softmax normalization: demand = (sum(e*item) / sum(e)) * cate.
    num = jnp.sum(e * item, axis=1)                   # (tb, H)
    inv = pl.reciprocal(jnp.sum(e, axis=1), approx=False)
    demand = num * inv * cate_g                       # (tb, H)
    # demand @ W^T with pre-transposed weight -> canonical MXU matmul.
    out_ref[0] = jnp.dot(demand, wt, preferred_element_type=jnp.float32)


def user_emb_pallas(item_emb, cate_emb, fc_w):
    B, S, H = item_emb.shape
    G = cate_emb.shape[1]
    tb = _batch_tile(B, S, H)
    nb = B // tb
    cate_t = jnp.transpose(cate_emb, (1, 0, 2))       # (G, B, H) group-major
    fc_wt = jnp.transpose(fc_w)                       # (H_in, H_out), one-time
    # TODO(synk): if H < 128 in production, pack groups along the lane axis to
    # recover lane utilization; here H>=128 is assumed for the real workload.
    cost = pl.CostEstimate(
        flops=G * (2 * B * H * H + 5 * B * S * H),
        transcendentals=G * B * S * H,
        bytes_accessed=4 * (B * S * H + 2 * G * B * H + H * H))
    user_t = pl.pallas_call(
        _user_emb_kernel,
        out_shape=jax.ShapeDtypeStruct((G, B, H), jnp.float32),
        grid=(nb, G),                                 # group axis innermost ->
        in_specs=[                                    # item block reused G times
            pl.BlockSpec((tb, S, H), lambda b, g: (b, 0, 0)),
            pl.BlockSpec((1, tb, H), lambda b, g: (g, b, 0)),
            pl.BlockSpec((H, H), lambda b, g: (0, 0)),
        ],
        out_specs=pl.BlockSpec((1, tb, H), lambda b, g: (g, b, 0)),
        compiler_params=pltpu.CompilerParams(
            dimension_semantics=("parallel", "parallel"),
            vmem_limit_bytes=48 * 1024 * 1024),       # fits v7x 64 MiB/TC
        cost_estimate=cost,
    )(item_emb, cate_t, fc_wt)
    return jnp.transpose(user_t, (1, 0, 2))           # (B, G, H)


# --------------------------------------------------------------------------
# Kernel 2: hard read-out (argmax over group-attention logits)
# --------------------------------------------------------------------------
def _readout_kernel(user_ref, lab_ref, readout_ref, picked_ref):
    user = user_ref[...]                              # (B, G, H) f32
    lab = lab_ref[...]                                # (B, H)
    B, G, _ = user.shape
    # softmax over groups is monotone -> argmax of raw logits is identical.
    atten = jnp.sum(user * lab[:, None, :], axis=-1)  # (B, G)
    g_iota = lax.broadcasted_iota(jnp.int32, (B, G), 1)
    is_max = atten == jnp.max(atten, axis=-1, keepdims=True)
    idx = jnp.min(jnp.where(is_max, g_iota, G), axis=-1, keepdims=True)
    onehot = (g_iota == idx).astype(jnp.float32)
    readout = jnp.sum(onehot[:, :, None] * user, axis=1)        # (B, H)
    readout_ref[...] = readout
    # picked logit == readout . emb_table[label] == readout . label_emb.
    picked_ref[...] = jnp.sum(readout * lab, axis=-1, keepdims=True)


def readout_pallas(user_emb, label_emb):
    B, G, H = user_emb.shape
    return pl.pallas_call(
        _readout_kernel,
        out_shape=(jax.ShapeDtypeStruct((B, H), jnp.float32),
                   jax.ShapeDtypeStruct((B, 1), jnp.float32)),
        grid=(1,),
        in_specs=[pl.BlockSpec((B, G, H), lambda i: (0, 0, 0)),
                  pl.BlockSpec((B, H), lambda i: (0, 0))],
        out_specs=(pl.BlockSpec((B, H), lambda i: (0, 0)),
                   pl.BlockSpec((B, 1), lambda i: (0, 0))),
    )(user_emb, label_emb)


# --------------------------------------------------------------------------
# Kernel 3: streamed scores over the item table -> online log-sum-exp
# --------------------------------------------------------------------------
def _lse_kernel(readout_ref, items_ref, m_ref, l_ref, *, n_valid):
    t = pl.program_id(1)
    abs_tile = pl.program_id(0) * pl.num_programs(1) + t
    tile_n = items_ref.shape[0]

    @pl.when(t == 0)
    def _init():
        m_ref[0] = jnp.full(m_ref.shape[1:], NEG_LARGE, jnp.float32)
        l_ref[0] = jnp.zeros(l_ref.shape[1:], jnp.float32)

    # readout (B,H) bf16 x items_tile (tile_n,H) bf16 -> f32 scores, no
    # in-kernel transpose (contract both on the last axis).
    s = lax.dot_general(readout_ref[...], items_ref[...],
                        (((1,), (1,)), ((), ())),
                        preferred_element_type=jnp.float32)      # (B, tile_n)
    col = abs_tile * tile_n + lax.broadcasted_iota(jnp.int32, s.shape, 1)
    s = jnp.where(col < n_valid, s, NEG_LARGE)        # mask padded columns

    m_prev = m_ref[0]
    m_new = jnp.maximum(m_prev, jnp.max(s, axis=-1, keepdims=True))
    l_ref[0] = (l_ref[0] * jnp.exp(m_prev - m_new)
                + jnp.sum(jnp.exp(s - m_new), axis=-1, keepdims=True))
    m_ref[0] = m_new


def lse_over_items_pallas(readout_f32, emb_table, *, tile_n=4096, num_splits=2):
    """Returns lse[b] = logsumexp_j(readout_b . emb_table_j) with the table
    streamed in bf16. num_splits=2 lets v7x run one split per TensorCore."""
    B, H = readout_f32.shape
    N1 = emb_table.shape[0]
    # Large, lane-dense, 256-aligned tiles (>= ~0.5 MiB DMAs amortize the
    # ~0.35us per-grid-step overhead on all generations).
    tile_n = max(256, min(tile_n, _round_up(-(-N1 // num_splits), 256)))
    tile_n = _round_up(tile_n, 256)
    n1p = _round_up(N1, tile_n * num_splits)
    n_tiles = n1p // tile_n
    tiles_per_split = n_tiles // num_splits

    # bf16 streamed operands, f32 MXU accumulation (halves HBM traffic).
    # TODO(synk): keep the table persistently in bf16 (or fp8 on v7x) in a
    # real training loop instead of casting per step.
    items = jnp.pad(emb_table, ((0, n1p - N1), (0, 0))).astype(jnp.bfloat16)
    readout_bf16 = readout_f32.astype(jnp.bfloat16)

    kernel = functools.partial(_lse_kernel, n_valid=N1)
    cost = pl.CostEstimate(
        flops=2 * B * n1p * H,
        transcendentals=B * n1p,
        bytes_accessed=2 * n1p * H + 2 * B * H + 8 * num_splits * B)
    # NOTE: if profiling shows exposed DMA after enlarging tile_n, add
    # pipeline_mode=pl.Buffered(3) to the items BlockSpec.
    m_parts, l_parts = pl.pallas_call(
        kernel,
        out_shape=(jax.ShapeDtypeStruct((num_splits, B, 1), jnp.float32),
                   jax.ShapeDtypeStruct((num_splits, B, 1), jnp.float32)),
        grid=(num_splits, tiles_per_split),
        in_specs=[
            pl.BlockSpec((B, H), lambda c, t: (0, 0)),
            pl.BlockSpec((tile_n, H),
                         lambda c, t: (c * tiles_per_split + t, 0)),
        ],
        out_specs=(pl.BlockSpec((1, B, 1), lambda c, t: (c, 0, 0)),
                   pl.BlockSpec((1, B, 1), lambda c, t: (c, 0, 0))),
        compiler_params=pltpu.CompilerParams(
            dimension_semantics=("parallel", "arbitrary"),
            vmem_limit_bytes=48 * 1024 * 1024),
        cost_estimate=cost,
    )(readout_bf16, items)

    # Combine per-split partial LSEs (tiny, done in the wrapper).
    m_all = jnp.max(m_parts, axis=0)                               # (B, 1)
    l_all = jnp.sum(l_parts * jnp.exp(m_parts - m_all), axis=0)    # (B, 1)
    return (m_all + jnp.log(l_all))[:, 0]                          # (B,)


# --------------------------------------------------------------------------
# Parameters & forward pass
# --------------------------------------------------------------------------
def init_params(key, num_items, num_cates, hidden_dim):
    k1, k2, k3 = jax.random.split(key, 3)
    # kaiming_normal_ on the Embedding weight: std = sqrt(2 / fan_in)
    emb = jax.random.normal(k1, (num_items + 1, hidden_dim),
                            jnp.float32) * jnp.sqrt(2.0 / hidden_dim)
    emb = emb.at[0].set(0.0)  # padding_idx=0
    # nn.Linear(H, H, bias=False) default init ~ U(-1/sqrt(H), 1/sqrt(H))
    fc_w = jax.random.uniform(k2, (hidden_dim, hidden_dim), jnp.float32,
                              -1.0 / jnp.sqrt(hidden_dim),
                              1.0 / jnp.sqrt(hidden_dim))
    cate_table = jax.random.normal(k3, (num_cates + 1, hidden_dim),
                                   jnp.float32) * 0.1
    return emb, fc_w, cate_table


def model_forward(params, item_list, long_cate_list, short_cate_list,
                  label_list, mask, train=True):
    emb_table, fc_w, cate_table = params
    # TODO(synk): surrogates for the undefined Interests / BuildSubGraph
    # submodules; long_cate_list is unused and grl_loss is 0.
    item_emb = emb_table[item_list] * mask[..., None]        # (B, S, H)
    cate_emb = cate_table[short_cate_list]                   # (B, G, H)
    grl_loss = jnp.zeros((), jnp.float32)

    user_emb = user_emb_pallas(item_emb, cate_emb, fc_w)     # (B, G, H)
    if not train:
        return user_emb

    label_emb = emb_table[label_list]                        # (B, H)
    readout, picked = readout_pallas(user_emb, label_emb)    # (B,H), (B,1)
    lse = lse_over_items_pallas(readout, emb_table)          # (B,)
    loss = jnp.mean(lse - picked[:, 0])                      # CrossEntropyLoss
    return user_emb, loss, grl_loss


# plain-JAX reference (mirrors the torch forward) for a sanity check
def reference_forward(params, item_list, short_cate_list, label_list, mask):
    emb_table, fc_w, cate_table = params
    item_emb = emb_table[item_list] * mask[..., None]
    cate_emb = cate_table[short_cate_list]
    label_emb = emb_table[label_list]
    B = item_emb.shape[0]
    G = cate_emb.shape[1]
    users = []
    for g in range(G):
        c = cate_emb[:, g, :]
        key = jax.nn.softmax(item_emb * c[:, None, :], axis=1)
        demand = jnp.sum(key * item_emb, axis=1) * c
        users.append(demand @ fc_w.T)
    user_emb = jnp.stack(users, 1)
    atten = jnp.einsum('bgh,bh->bg', user_emb, label_emb)
    idx = jnp.argmax(jax.nn.softmax(atten, axis=-1), axis=-1)
    readout = user_emb[jnp.arange(B), idx]
    scores = readout @ emb_table.T
    logp = jax.nn.log_softmax(scores, axis=-1)
    loss = -jnp.mean(logp[jnp.arange(B), label_list])
    return user_emb, loss


if __name__ == "__main__":
    B, S, H, G = 4, 8, 32, 4
    num_items, num_cates = 50, 10

    key = jax.random.PRNGKey(0)
    kp, k1, k2, k3, k4, k5 = jax.random.split(key, 6)
    params = init_params(kp, num_items, num_cates, H)

    item_list = jax.random.randint(k1, (B, S), 1, num_items + 1)
    long_cate_list = jax.random.randint(k2, (B, S), 1, num_cates + 1)
    short_cate_list = jax.random.randint(k3, (B, G), 1, num_cates + 1)
    label_list = jax.random.randint(k4, (B,), 1, num_items + 1)
    mask = (jax.random.uniform(k5, (B, S)) > 0.2).astype(jnp.float32)

    user_emb, loss, grl_loss = jax.block_until_ready(
        model_forward(params, item_list, long_cate_list, short_cate_list,
                      label_list, mask))

    ref_user, ref_loss = reference_forward(
        params, item_list, short_cate_list, label_list, mask)

    assert jnp.allclose(user_emb, ref_user, atol=1e-4, rtol=1e-4)
    # The score matmul streams the item table in bf16 (f32 accumulation), so
    # the CE loss is compared at a bf16-level tolerance.
    assert jnp.allclose(loss, ref_loss, atol=1e-2, rtol=1e-3), (loss, ref_loss)
    assert jnp.allclose(grl_loss, 0.0)

    print("KERNEL_OK")
</pallas_src>

<mosaic_0001>
module attributes {stable_mosaic.version = 11 : i64} {
  func.func @_user_emb_kernel(%arg0: i32, %arg1: i32, %arg2: memref<4x8x32xf32, #tpu.memory_space<vmem>>, %arg3: memref<1x4x32xf32, #tpu.memory_space<vmem>>, %arg4: memref<32x32xf32, #tpu.memory_space<vmem>>, %arg5: memref<1x4x32xf32, #tpu.memory_space<vmem>>) attributes {dimension_semantics = [#tpu.dimension_semantics<parallel>, #tpu.dimension_semantics<parallel>], iteration_bounds = array<i64: 1, 4>, scalar_prefetch = 0 : i64, scratch_operands = 0 : i64, tpu.core_type = #tpu.core_type<tc>, window_params = [{transform_indices = @transform_0, window_bounds = array<i64: 4, 8, 32>}, {transform_indices = @transform_1, window_bounds = array<i64: 1, 4, 32>}, {pipeline_mode = #tpu.pipeline_mode<synchronous>, transform_indices = @transform_2, window_bounds = array<i64: 32, 32>}, {transform_indices = @transform_3, window_bounds = array<i64: 1, 4, 32>}]} {
    %c0 = arith.constant 0 : index
    %c0_0 = arith.constant 0 : index
    %c0_1 = arith.constant 0 : index
    %0 = vector.load %arg2[%c0, %c0_0, %c0_1] : memref<4x8x32xf32, #tpu.memory_space<vmem>>, vector<4x8x32xf32>
    %c0_2 = arith.constant 0 : index
    %c0_3 = arith.constant 0 : index
    %c0_4 = arith.constant 0 : index
    %1 = vector.load %arg3[%c0_2, %c0_3, %c0_4] : memref<1x4x32xf32, #tpu.memory_space<vmem>>, vector<1x4x32xf32>
    %2 = vector.shape_cast %1 : vector<1x4x32xf32> to vector<4x32xf32>
    %c0_5 = arith.constant 0 : index
    %c0_6 = arith.constant 0 : index
    %3 = vector.load %arg4[%c0_5, %c0_6] : memref<32x32xf32, #tpu.memory_space<vmem>>, vector<32x32xf32>
    %4 = vector.shape_cast %2 : vector<4x32xf32> to vector<4x1x32xf32>
    %5 = vector.broadcast %4 : vector<4x1x32xf32> to vector<4x8x32xf32>
    %6 = arith.mulf %0, %5 : vector<4x8x32xf32>
    %cst = arith.constant dense<0xFF800000> : vector<4x32xf32>
    %7 = vector.multi_reduction <maximumf>, %6, %cst [1] : vector<4x8x32xf32> to vector<4x32xf32>
    %8 = vector.shape_cast %7 : vector<4x32xf32> to vector<4x1x32xf32>
    %9 = vector.broadcast %8 : vector<4x1x32xf32> to vector<4x8x32xf32>
    %10 = arith.subf %6, %9 : vector<4x8x32xf32>
    %11 = math.exp %10 : vector<4x8x32xf32>
    %12 = arith.mulf %11, %0 : vector<4x8x32xf32>
    %cst_7 = arith.constant dense<0.000000e+00> : vector<4x32xf32>
    %13 = vector.multi_reduction <add>, %12, %cst_7 [1] : vector<4x8x32xf32> to vector<4x32xf32>
    %cst_8 = arith.constant dense<0.000000e+00> : vector<4x32xf32>
    %14 = vector.multi_reduction <add>, %11, %cst_8 [1] : vector<4x8x32xf32> to vector<4x32xf32>
    %15 = tpu.reciprocal %14 : vector<4x32xf32> -> vector<4x32xf32>
    %16 = arith.mulf %13, %15 : vector<4x32xf32>
    %17 = arith.mulf %16, %2 : vector<4x32xf32>
    %cst_9 = arith.constant dense<0.000000e+00> : vector<4x32xf32>
    %18 = tpu.matmul %17, %3, %cst_9 {dimension_numbers = #tpu.dot_dimension_numbers<[1], [0], [0], [1], [0, 0, 1, 1], [], []>} : vector<4x32xf32>, vector<32x32xf32>, vector<4x32xf32> -> vector<4x32xf32>
    %c0_10 = arith.constant 0 : index
    %c0_11 = arith.constant 0 : index
    %c0_12 = arith.constant 0 : index
    %19 = vector.load %arg5[%c0_10, %c0_11, %c0_12] : memref<1x4x32xf32, #tpu.memory_space<vmem>>, vector<1x4x32xf32>
    %20 = vector.shape_cast %19 : vector<1x4x32xf32> to vector<4x32xf32>
    %21 = vector.shape_cast %18 : vector<4x32xf32> to vector<1x4x32xf32>
    tpu.vector_store %arg5[%c0_10, %c0_11, %c0_12], %21 {strides = array<i32>} : memref<1x4x32xf32, #tpu.memory_space<vmem>>, vector<1x4x32xf32>,
    return
  }
  func.func @transform_0(%arg0: i32, %arg1: i32) -> (i32, i32, i32) {
    %c0_i32 = arith.constant 0 : i32
    %c0_i32_0 = arith.constant 0 : i32
    %c0_i32_1 = arith.constant 0 : i32
    return %arg0, %c0_i32, %c0_i32_0 : i32, i32, i32
  }
  func.func @transform_1(%arg0: i32, %arg1: i32) -> (i32, i32, i32) {
    %c0_i32 = arith.constant 0 : i32
    %c0_i32_0 = arith.constant 0 : i32
    return %arg1, %arg0, %c0_i32 : i32, i32, i32
  }
  func.func @transform_2(%arg0: i32, %arg1: i32) -> (i32, i32) {
    %c0_i32 = arith.constant 0 : i32
    %c0_i32_0 = arith.constant 0 : i32
    %c0_i32_1 = arith.constant 0 : i32
    return %c0_i32, %c0_i32_0 : i32, i32
  }
  func.func @transform_3(%arg0: i32, %arg1: i32) -> (i32, i32, i32) {
    %c0_i32 = arith.constant 0 : i32
    %c0_i32_0 = arith.constant 0 : i32
    return %arg1, %arg0, %c0_i32 : i32, i32, i32
  }
}

</mosaic_0001>

<llo_original>
// kernel: tpu_custom_call.1
$region0: #{tpu_custom_call.1}
  #allocation0 [shape = 'u32[]', space=smem, size = 0x4, offset = 0x4, fixed_abs, tag = 'smem constant byte address 0x4 - core index']
  #allocation1 [shape = 'u32[144,128]{1,0:T(1,128)}', space=vmem, size = 0x12000, scoped, tag = 'internal scratch']
  %s0 = inlined_call_operand.hbm [shape: f32[4,8,32], index: 0, kind: input, shape index: {}]
  %s1 = inlined_call_operand.hbm [shape: f32[4,4,32], index: 1, kind: input, shape index: {}]
  %s2 = inlined_call_operand.hbm [shape: f32[32,32], index: 2, kind: input, shape index: {}]
  %s3 = inlined_call_operand.hbm [shape: f32[4,4,32], index: 3, kind: output, shape index: {}]
  %s4 = sld [smem:[#allocation0]]
  $region57: #{tpu_custom_call.1} parent=0
    _
  %s6 = ssub.s32 1, %s4
  %s7 = scalar_select 0, %s6, %s4
  $region1: #{tpu_custom_call.1} parent=0
    #allocation2 [shape = 'u8[16384]{0}', space=vmem, size = 0x4000, scoped, tag = 'input window, operand 0, single buffered']
    #allocation3 [shape = 's32[2]{0}', space=sflag, size = 0x8, scoped, tag = 'scoped memory for tpu_custom_call.1']
    #allocation4 [shape = 's32[2]{0}', space=sflag, size = 0x8, scoped, tag = 'scoped memory for tpu_custom_call.1']
    #allocation5 [shape = 'u8[4096]{0}', space=vmem, size = 0x1000, scoped, tag = 'input window, operand 1']
    #allocation6 [shape = 's32[2]{0}', space=sflag, size = 0x8, scoped, tag = 'scoped memory for tpu_custom_call.1']
    #allocation7 [shape = 'u8[16384]{0}', space=vmem, size = 0x4000, scoped, tag = 'input window, operand 2, single buffered']
    #allocation8 [shape = 'u8[4096]{0}', space=vmem, size = 0x1000, scoped, tag = 'output window, operand 0']
    %8 = vsyncpa [#allocation3], 0
    %9 = vsyncpa [#allocation6], 0
    %s10 = scalar_lea.sflag [#allocation6], 1
    %11 = vsyncpa %s10, 0
    %12 = vsyncpa [#allocation4], 0
    %s13 = scalar_lea.sflag [#allocation4], 1
    %14 = vsyncpa %s13, 0
    loop: start=0, step=1, limit=6
    $region2: #{tpu_custom_call.1} parent=1 // loop_pre_header
      _
    $region3: #{tpu_custom_call.1} parent=1 // loop_header
      %s16 = sphi 0, %s20
      %p17 = scmp.ge.s32.totalorder %s16, 6
      %s23 = sphi 0, %s35
      %s24 = sphi 0, %s31
      %s25 = sphi 0, %s23
      %s26 = sphi 0, %s24
      %s27 = sphi 0, %s25
      %s28 = sphi 0, %s26
      %s38 = sphi 0, %s40
      %s41 = sphi 0, %s38
      %s42 = sphi 0, %s41
      %s58 = sphi 0, %s42
      %s66 = sphi 0, %s68
      %s69 = sphi 0, %s66
      %s70 = sphi 0, %s69
      %s86 = sphi 0, %s70
      %s90 = sphi 0, %s90
      %s92 = sphi 0, %s90
      %s93 = sphi 0, %s92
      %s107 = sphi 0, %s93
      %s115 = sphi 0, %s117
      %s118 = sphi 0, %s115
      %s119 = sphi 0, %s118
      %s135 = sphi 0, %s119
    $region4: #{tpu_custom_call.1} parent=1 // loop_header_branch
      %19 = sbr.rel (%p17) target = $region8
    $region5: #{tpu_custom_call.1} parent=1 // loop_body
      %s21 = ssub.s32 %s16, 1
      %s22 = ssub.s32 %s16, 2
      %s29 = sadd.s32 1, %s24
      %p30 = scmp.ge.s32.totalorder %s29, 4
      %s31 = scalar_select %p30, 0, %s29
      %s32 = sadd.s32 1, %s23
      %s33 = scalar_select %p30, %s32, %s23
      %p34 = scmp.ge.s32.totalorder %s33, 1
      %s35 = scalar_select %p34, 0, %s33
      %s36 = ssub.s32 %s23, %s35
      %p37 = scmp.eq.s32.totalorder %s36, 0
      %s39 = sadd.s32 %s38, 1
      %s40 = scalar_select %p37, %s38, %s39
      %p43 = pneg %p37
      %p44 = scmp.eq.s32.totalorder %s16, 3
      %p45 = por %p43, %p44
      %p46 = scmp.ne.s32.totalorder %s38, %s41
      %p47 = scmp.eq.s32.totalorder %s16, 0
      %p48 = por %p46, %p47
      %p49 = scmp.ne.s32.totalorder %s38, %s41
      %p50 = scmp.eq.s32.totalorder %s21, 3
      %p51 = por %p49, %p50
      %p52 = scmp.ne.s32.totalorder %s41, %s42
      %p53 = scmp.eq.s32.totalorder %s21, 0
      %p54 = por %p52, %p53
      %p55 = scmp.ne.s32.totalorder %s41, %s42
      %p56 = scmp.eq.s32.totalorder %s22, 3
      %p57 = por %p55, %p56
      %p59 = scmp.ne.s32.totalorder %s42, %s58
      %p60 = scmp.eq.s32.totalorder %s22, 0
      %p61 = por %p59, %p60
      %s62 = ssub.s32 %s24, %s31
      %s63 = ssub.s32 %s23, %s35
      %s64 = sor.u32 %s62, %s63
      %p65 = scmp.eq.s32.totalorder %s64, 0
      %s67 = sadd.s32 %s66, 1
      %s68 = scalar_select %p65, %s66, %s67
      %p71 = pneg %p65
      %p72 = scmp.eq.s32.totalorder %s16, 3
      %p73 = por %p71, %p72
      %p74 = scmp.ne.s32.totalorder %s66, %s69
      %p75 = scmp.eq.s32.totalorder %s16, 0
      %p76 = por %p74, %p75
      %p77 = scmp.ne.s32.totalorder %s66, %s69
      %p78 = scmp.eq.s32.totalorder %s21, 3
      %p79 = por %p77, %p78
      %p80 = scmp.ne.s32.totalorder %s69, %s70
      %p81 = scmp.eq.s32.totalorder %s21, 0
      %p82 = por %p80, %p81
      %p83 = scmp.ne.s32.totalorder %s69, %s70
      %p84 = scmp.eq.s32.totalorder %s22, 3
      %p85 = por %p83, %p84
      %p87 = scmp.ne.s32.totalorder %s70, %s86
      %p88 = scmp.eq.s32.totalorder %s22, 0
      %p89 = por %p87, %p88
      %s91 = sadd.s32 %s90, 1
      %p94 = scmp.eq.s32.totalorder %s16, 3
      %p95 = scmp.ne.s32.totalorder %s90, %s92
      %p96 = scmp.eq.s32.totalorder %s16, 0
      %p97 = por %p95, %p96
      %p98 = scmp.ne.s32.totalorder %s90, %s92
      %p99 = scmp.eq.s32.totalorder %s21, 3
      %p100 = por %p98, %p99
      %p101 = scmp.ne.s32.totalorder %s92, %s93
      %p102 = scmp.eq.s32.totalorder %s21, 0
      %p103 = por %p101, %p102
      %p104 = scmp.ne.s32.totalorder %s92, %s93
      %p105 = scmp.eq.s32.totalorder %s22, 3
      %p106 = por %p104, %p105
      %p108 = scmp.ne.s32.totalorder %s93, %s107
      %p109 = scmp.eq.s32.totalorder %s22, 0
      %p110 = por %p108, %p109
      %s111 = ssub.s32 %s24, %s31
      %s112 = ssub.s32 %s23, %s35
      %s113 = sor.u32 %s111, %s112
      %p114 = scmp.eq.s32.totalorder %s113, 0
      %s116 = sadd.s32 %s115, 1
      %s117 = scalar_select %p114, %s115, %s116
      %p120 = pneg %p114
      %p121 = scmp.eq.s32.totalorder %s16, 3
      %p122 = por %p120, %p121
      %p123 = scmp.ne.s32.totalorder %s115, %s118
      %p124 = scmp.eq.s32.totalorder %s16, 0
      %p125 = por %p123, %p124
      %p126 = scmp.ne.s32.totalorder %s115, %s118
      %p127 = scmp.eq.s32.totalorder %s21, 3
      %p128 = por %p126, %p127
      %p129 = scmp.ne.s32.totalorder %s118, %s119
      %p130 = scmp.eq.s32.totalorder %s21, 0
      %p131 = por %p129, %p130
      %p132 = scmp.ne.s32.totalorder %s118, %s119
      %p133 = scmp.eq.s32.totalorder %s22, 3
      %p134 = por %p132, %p133
      %p136 = scmp.ne.s32.totalorder %s119, %s135
      %p137 = scmp.eq.s32.totalorder %s22, 0
      %p138 = por %p136, %p137
      %p139 = scmp.le.s32.totalorder 1, %s16
      %p140 = scmp.lt.s32.totalorder %s16, 5
      %p141 = pnand %p139, %p140
      %p142 = pneg %p141
      // Predicated region
      $region9: #{tpu_custom_call.1} parent=5 // pred_check
        _
      $region10: #{tpu_custom_call.1} parent=5 // pred_check_branch
        %144 = sbr.rel (%p141) target = $region12
      $region11: #{tpu_custom_call.1} parent=5 // pred_region
        %s145 = ssub.s32 %s16, 1
        // Predicated region
        $region13: #{tpu_custom_call.1} parent=11 // pred_check
          %p146 = pneg %p54
        $region14: #{tpu_custom_call.1} parent=11 // pred_check_branch
          %148 = sbr.rel (%p146) target = $region16
        $region15: #{tpu_custom_call.1} parent=11 // pred_region
          %s149 = smul.u32 4, %s25
          %s151 = ssub.s32 512, 512
          %152 = vsyncadd [#allocation3], %s151
          %s153 = smul.addr %s149, 128
          %s154 = scalar_lea.hbm %s0, %s153
          %s155 = sshll.u32 [#allocation2], 4
          %s156 = int_to_ptr.vmem [resolvable:$true] %s155
          %161 = dma.hbm_to_vmem [thread:$0]  %s154, 512, %s156, [#allocation3], 128, 128, 8
        $region16: #{tpu_custom_call.1} parent=11 // pred_fallthru
          _
        // Predicated region
        $region17: #{tpu_custom_call.1} parent=11 // pred_check
          %p162 = pneg %p103
        $region18: #{tpu_custom_call.1} parent=11 // pred_check_branch
          %164 = sbr.rel (%p162) target = $region20
        $region19: #{tpu_custom_call.1} parent=11 // pred_region
          %s166 = ssub.s32 512, 512
          %167 = vsyncadd [#allocation6], %s166
          %s168 = sshll.u32 [#allocation7], 4
          %s169 = int_to_ptr.vmem [resolvable:$true] %s168
          %174 = dma.hbm_to_vmem [thread:$0]  %s2, 512, %s169, [#allocation6], 128, 128, 8
        $region20: #{tpu_custom_call.1} parent=11 // pred_fallthru
          _
      $region12: #{tpu_custom_call.1} parent=5 // pred_fallthru
        _
      %p175 = scmp.lt.s32.totalorder %s16, 4
      // Predicated region
      $region21: #{tpu_custom_call.1} parent=5 // pred_check
        %p176 = pneg %p175
      $region22: #{tpu_custom_call.1} parent=5 // pred_check_branch
        %178 = sbr.rel (%p176) target = $region24
      $region23: #{tpu_custom_call.1} parent=5 // pred_region
        // Predicated region
        $region25: #{tpu_custom_call.1} parent=23 // pred_check
          %p179 = pneg %p76
        $region26: #{tpu_custom_call.1} parent=23 // pred_check_branch
          %181 = sbr.rel (%p179) target = $region28
        $region27: #{tpu_custom_call.1} parent=23 // pred_region
          %s182 = sand.u32 %s16, 1
          %s183 = scalar_lea.sflag [#allocation6], %s182
          %s184 = sand.u32 %s66, 1
          %s185 = smul.addr %s184, 4
          %s186 = scalar_lea.vmem [#allocation5], %s185
          %s188 = ssub.s32 64, 64
          %189 = vsyncadd %s183, %s188
          %s190 = sadd.s32 %s23, %s24
          %s191 = smul.addr %s190, 64
          %s192 = scalar_lea.hbm %s1, %s191
          %s194 = sshll.u32 %s186, 4
          %s195 = int_to_ptr.vmem [resolvable:$true] %s194
          %197 = dma.hbm_to_vmem [thread:$0]  %s192, 64, %s195, %s183
        $region28: #{tpu_custom_call.1} parent=23 // pred_fallthru
          _
      $region24: #{tpu_custom_call.1} parent=5 // pred_fallthru
        _
      %p198 = scmp.le.s32.totalorder 1, %s16
      %p199 = scmp.lt.s32.totalorder %s16, 5
      %p200 = pnand %p198, %p199
      %p201 = pneg %p200
      // Predicated region
      $region29: #{tpu_custom_call.1} parent=5 // pred_check
        _
      $region30: #{tpu_custom_call.1} parent=5 // pred_check_branch
        %203 = sbr.rel (%p200) target = $region32
      $region31: #{tpu_custom_call.1} parent=5 // pred_region
        %s204 = ssub.s32 %s16, 1
        // Predicated region
        $region33: #{tpu_custom_call.1} parent=31 // pred_check
          %p205 = pneg %p54
        $region34: #{tpu_custom_call.1} parent=31 // pred_check_branch
          %207 = sbr.rel (%p205) target = $region36
        $region35: #{tpu_custom_call.1} parent=31 // pred_region
          %208 = dma.done [#allocation3], 512
        $region36: #{tpu_custom_call.1} parent=31 // pred_fallthru
          _
        %s209 = sand.u32 %s21, 1
        %s210 = scalar_lea.sflag [#allocation6], %s209
        %s211 = sand.u32 %s69, 1
        %s212 = smul.addr %s211, 4
        %s213 = scalar_lea.vmem [#allocation5], %s212
        // Predicated region
        $region37: #{tpu_custom_call.1} parent=31 // pred_check
          %p214 = pneg %p82
        $region38: #{tpu_custom_call.1} parent=31 // pred_check_branch
          %216 = sbr.rel (%p214) target = $region40
        $region39: #{tpu_custom_call.1} parent=31 // pred_region
          %217 = dma.done %s210, 64
        $region40: #{tpu_custom_call.1} parent=31 // pred_fallthru
          _
        // Predicated region
        $region41: #{tpu_custom_call.1} parent=31 // pred_check
          %p218 = pneg %p103
        $region42: #{tpu_custom_call.1} parent=31 // pred_check_branch
          %220 = sbr.rel (%p218) target = $region44
        $region43: #{tpu_custom_call.1} parent=31 // pred_region
          %221 = dma.done [#allocation6], 512
        $region44: #{tpu_custom_call.1} parent=31 // pred_fallthru
          _
        %p222 = pneg %p54
        %p223 = pneg %p51
        %s224 = sand.u32 %s21, 1
        %s225 = scalar_lea.sflag [#allocation6], %s224
        %s226 = sand.u32 %s69, 1
        %s227 = smul.addr %s226, 4
        %s228 = scalar_lea.vmem [#allocation5], %s227
        %p229 = pneg %p82
        %p230 = pneg %p79
        %p231 = pneg %p103
        %p232 = pneg %p100
        %p233 = pneg %p131
        %p234 = pneg %p128
        %s235 = sand.u32 %s118, 1
        %s236 = scalar_lea.sflag [#allocation4], %s235
        %s237 = sand.u32 %s118, 1
        %s238 = smul.addr %s237, 4
        %s239 = scalar_lea.vmem [#allocation8], %s238
        %s240 = smul.u32 4, %s25
        %v241 = vld [vmem:[#allocation2] sm:$0xff]
        %v242 = vld [vmem:[#allocation2 + $0x8] sm:$0xff]
        %v243 = vld [vmem:[#allocation2 + $0x10] sm:$0xff]
        %v244 = vld [vmem:[#allocation2 + $0x18] sm:$0xff]
        %v245 = vld [vmem:[%s213] sm:$0xf]
        %v246 = vld [vmem:[#allocation7] sm:$0xff]
        %v247 = vld [vmem:[#allocation7 + $0x8] sm:$0xff]
        %v248 = vld [vmem:[#allocation7 + $0x10] sm:$0xff]
        %v249 = vld [vmem:[#allocation7 + $0x18] sm:$0xff]
        %v252 = vunpack.c.l.s4 1966171168
        %v253 = vunpack.c.0.s8 %v252
        %v254 = vlaneseq
        %v255 = vshrl.u32 %v254, 7
        %v256 = vsub.s32 %v253, %v255
        %v257 = vrot.slane %v245, %v256
        %v258 = vcombine.high %v257, %v257
        %v260 = vunpack.c.l.s4 1966171168
        %v261 = vunpack.c.0.s8 %v260
        %v262 = vlaneseq
        %v263 = vshrl.u32 %v262, 7
        %v264 = vsub.s32 %v261, %v263
        %v265 = vrot.slane %v257, %v264
        %v267 = vunpack.c.l.s4 1966171168
        %v268 = vunpack.c.0.s8 %v267
        %v269 = vlaneseq
        %v270 = vshrl.u32 %v269, 7
        %v271 = vsub.s32 %v268, %v270
        %v272 = vrot.slane %v258, %v271
        %v273 = vcombine.high %v265, %v265
        %v274 = vcombine.high %v272, %v272
        %v275 = vlaneseq
        %v276 = vshrl.u32 %v275, 7
        %v277 = vsub.s32 0, %v276
        %v278 = vrot.slane %v265, %v277
        %v279 = vlaneseq
        %v280 = vshrl.u32 %v279, 7
        %v281 = vsub.s32 0, %v280
        %v282 = vrot.slane %v272, %v281
        %v283 = vlaneseq
        %v284 = vshrl.u32 %v283, 7
        %v285 = vsub.s32 0, %v284
        %v286 = vrot.slane %v273, %v285
        %v287 = vlaneseq
        %v288 = vshrl.u32 %v287, 7
        %v289 = vsub.s32 0, %v288
        %v290 = vrot.slane %v274, %v289
        %v295 = vmul.f32 %v241, %v278
        %v296 = vmul.f32 %v242, %v282
        %v297 = vmul.f32 %v243, %v286
        %v298 = vmul.f32 %v244, %v290
        %vm299 = vcmask 261120
        %v300 = vsel %vm299, %v295, -inf
        %v301 = vrot.slane %v300, 4
        %v302 = vmax.f32 %v300, %v301
        %v303 = vrot.slane %v302, 2
        %v304 = vmax.f32 %v302, %v303
        %v305 = vrot.slane %v304, 1
        %v306 = vmax.f32 %v304, %v305
        %v307 = vsel %vm299, %v296, -inf
        %v308 = vrot.slane %v307, 4
        %v309 = vmax.f32 %v307, %v308
        %v310 = vrot.slane %v309, 2
        %v311 = vmax.f32 %v309, %v310
        %v312 = vrot.slane %v311, 1
        %v313 = vmax.f32 %v311, %v312
        %v314 = vsel %vm299, %v297, -inf
        %v315 = vrot.slane %v314, 4
        %v316 = vmax.f32 %v314, %v315
        %v317 = vrot.slane %v316, 2
        %v318 = vmax.f32 %v316, %v317
        %v319 = vrot.slane %v318, 1
        %v320 = vmax.f32 %v318, %v319
        %v321 = vsel %vm299, %v298, -inf
        %v322 = vrot.slane %v321, 4
        %v323 = vmax.f32 %v321, %v322
        %v324 = vrot.slane %v323, 2
        %v325 = vmax.f32 %v323, %v324
        %v326 = vrot.slane %v325, 1
        %v327 = vmax.f32 %v325, %v326
        %v328 = vsub.f32 %v295, %v306
        %v329 = vsub.f32 %v296, %v313
        %v330 = vsub.f32 %v297, %v320
        %v331 = vsub.f32 %v298, %v327
        %v332 = vmul.f32 %v328, 1.442695
        %v333 = vpow.pop %v332
        %v334 = vmul.f32 %v329, 1.442695
        %v335 = vpow.pop %v334
        %v336 = vmul.f32 %v330, 1.442695
        %v337 = vpow.pop %v336
        %v338 = vmul.f32 %v331, 1.442695
        %v339 = vpow.pop %v338
        %v340 = vmul.f32 %v333, %v241
        %v341 = vmul.f32 %v335, %v242
        %v342 = vmul.f32 %v337, %v243
        %v343 = vmul.f32 %v339, %v244
        %v344 = vsel %vm299, %v340, 0.0
        %v345 = vrot.slane %v344, 4
        %v346 = vadd.f32 %v344, %v345
        %v347 = vrot.slane %v346, 2
        %v348 = vadd.f32 %v346, %v347
        %v349 = vrot.slane %v348, 1
        %v350 = vadd.f32 %v348, %v349
        %v351 = vsel %vm299, %v341, 0.0
        %v352 = vrot.slane %v351, 4
        %v353 = vadd.f32 %v351, %v352
        %v354 = vrot.slane %v353, 2
        %v355 = vadd.f32 %v353, %v354
        %v356 = vrot.slane %v355, 1
        %v357 = vadd.f32 %v355, %v356
        %v358 = vsel %vm299, %v342, 0.0
        %v359 = vrot.slane %v358, 4
        %v360 = vadd.f32 %v358, %v359
        %v361 = vrot.slane %v360, 2
        %v362 = vadd.f32 %v360, %v361
        %v363 = vrot.slane %v362, 1
        %v364 = vadd.f32 %v362, %v363
        %v365 = vsel %vm299, %v343, 0.0
        %v366 = vrot.slane %v365, 4
        %v367 = vadd.f32 %v365, %v366
        %v368 = vrot.slane %v367, 2
        %v369 = vadd.f32 %v367, %v368
        %v370 = vrot.slane %v369, 1
        %v371 = vadd.f32 %v369, %v370
        %v372 = vsel %vm299, %v333, 0.0
        %v373 = vrot.slane %v372, 4
        %v374 = vadd.f32 %v372, %v373
        %v375 = vrot.slane %v374, 2
        %v376 = vadd.f32 %v374, %v375
        %v377 = vrot.slane %v376, 1
        %v378 = vadd.f32 %v376, %v377
        %v379 = vsel %vm299, %v335, 0.0
        %v380 = vrot.slane %v379, 4
        %v381 = vadd.f32 %v379, %v380
        %v382 = vrot.slane %v381, 2
        %v383 = vadd.f32 %v381, %v382
        %v384 = vrot.slane %v383, 1
        %v385 = vadd.f32 %v383, %v384
        %v386 = vsel %vm299, %v337, 0.0
        %v387 = vrot.slane %v386, 4
        %v388 = vadd.f32 %v386, %v387
        %v389 = vrot.slane %v388, 2
        %v390 = vadd.f32 %v388, %v389
        %v391 = vrot.slane %v390, 1
        %v392 = vadd.f32 %v390, %v391
        %v393 = vsel %vm299, %v339, 0.0
        %v394 = vrot.slane %v393, 4
        %v395 = vadd.f32 %v393, %v394
        %v396 = vrot.slane %v395, 2
        %v397 = vadd.f32 %v395, %v396
        %v398 = vrot.slane %v397, 1
        %v399 = vadd.f32 %v397, %v398
        %v400 = vrcp.pop %v378
        %v401 = vrcp.pop %v385
        %v402 = vrcp.pop %v392
        %v403 = vrcp.pop %v399
        %v404 = vmul.f32 %v350, %v400
        %v405 = vmul.f32 %v357, %v401
        %v406 = vmul.f32 %v364, %v402
        %v407 = vmul.f32 %v371, %v403
        %v408 = vrot.slane %v245, 1
        %v409 = vrot.slane %v245, 2
        %v410 = vrot.slane %v245, 3
        %v415 = vmul.f32 %v404, %v245
        %v416 = vmul.f32 %v405, %v408
        %v417 = vmul.f32 %v406, %v409
        %v418 = vmul.f32 %v407, %v410
        %v423 = vrot.slane %v416, 7
        %vm424 = vcmask 1041409
        %v425 = vsel %vm424, %v423, %v415
        %v426 = vrot.slane %v417, 6
        %vm427 = vcmask 1042434
        %v428 = vsel %vm427, %v426, %v425
        %v429 = vrot.slane %v418, 5
        %vm430 = vcmask 1043459
        %v431 = vsel %vm430, %v429, %v428
        %v432 = vsel %vm299, %v431, 0
        %434 = vmatprep.subr.mxu0 0.0
        %435 = vmatpush1.msra.mxu0 %v246
        %436 = vmatprep.subr.mxu0 0.0
        %437 = vmatpush1.msra.mxu0 %v247
        %438 = vmatprep.subr.mxu0 0.0
        %439 = vmatpush1.msra.mxu0 %v248
        %440 = vmatprep.subr.mxu0 0.0
        %441 = vmatpush1.msra.mxu0 %v249
        %442 = vmatprep.subr.mxu0 0.0
        %443 = vmatpush1.msra.mxu0 0.0
        %444 = vmatprep.subr.mxu0 0.0
        %445 = vmatpush1.msra.mxu0 0.0
        %446 = vmatprep.subr.mxu0 0.0
        %447 = vmatpush1.msra.mxu0 0.0
        %448 = vmatprep.subr.mxu0 0.0
        %449 = vmatpush1.msra.mxu0 0.0
        %450 = vmatprep.subr.mxu0 0.0
        %451 = vmatpush1.msra.mxu0 0.0
        %452 = vmatprep.subr.mxu0 0.0
        %453 = vmatpush1.msra.mxu0 0.0
        %454 = vmatprep.subr.mxu0 0.0
        %455 = vmatpush1.msra.mxu0 0.0
        %456 = vmatprep.subr.mxu0 0.0
        %457 = vmatpush1.msra.mxu0 0.0
        %458 = vmatprep.subr.mxu0 0.0
        %459 = vmatpush1.msra.mxu0 0.0
        %460 = vmatprep.subr.mxu0 0.0
        %461 = vmatpush1.msra.mxu0 0.0
        %462 = vmatprep.subr.mxu0 0.0
        %463 = vmatpush1.msra.mxu0 0.0
        %464 = vmatprep.subr.mxu0 0.0
        %465 = vmatpush1.msra.mxu0 0.0
        %466 = vmatprep.subr.mxu0 0.0
        %467 = vmatpush1.msra.mxu0 0.0
        %468 = vmatprep.subr.mxu0 0.0
        %469 = vmatpush1.msra.mxu0 0.0
        %470 = vmatprep.subr.mxu0 0.0
        %471 = vmatpush1.msra.mxu0 0.0
        %472 = vmatprep.subr.mxu0 0.0
        %473 = vmatpush1.msra.mxu0 0.0
        %474 = vmatprep.subr.mxu0 0.0
        %475 = vmatpush1.msra.mxu0 0.0
        %476 = vmatprep.subr.mxu0 0.0
        %477 = vmatpush1.msra.mxu0 0.0
        %478 = vmatprep.subr.mxu0 0.0
        %479 = vmatpush1.msra.mxu0 0.0
        %480 = vmatprep.subr.mxu0 0.0
        %481 = vmatpush1.msra.mxu0 0.0
        %482 = vmatprep.subr.mxu0 0.0
        %483 = vmatpush1.msra.mxu0 0.0
        %484 = vmatprep.subr.mxu0 0.0
        %485 = vmatpush1.msra.mxu0 0.0
        %486 = vmatprep.subr.mxu0 0.0
        %487 = vmatpush1.msra.mxu0 0.0
        %488 = vmatprep.subr.mxu0 0.0
        %489 = vmatpush1.msra.mxu0 0.0
        %490 = vmatprep.subr.mxu0 0.0
        %491 = vmatpush1.msra.mxu0 0.0
        %492 = vmatprep.subr.mxu0 0.0
        %493 = vmatpush1.msra.mxu0 0.0
        %494 = vmatprep.subr.mxu0 0.0
        %495 = vmatpush1.msra.mxu0 0.0
        %496 = vmatprep.subr.mxu0 0.0
        %497 = vmatpush1.msra.mxu0 0.0
        %498 = vmatprep.mubr.f32.mxu0 0.0
        %499 = vmatmul.mubr.f32.gmra.mrb[0].mxu0 %v432
        %v500 = vpop.f32.mrb[0].mxu0
        %v501 = vadd.f32 0.0, %v500
        %v502 = vpop.f32.mrb[0].mxu0
        %503 = vdwg.mxu0
        %vm504 = vcmask 257024
        %505 = vst.msk [vmem:[%s239] sm:$0xf] %vm504, %v501
        %s506 = sand.u32 %s118, 1
        %s507 = scalar_lea.sflag [#allocation4], %s506
        %s508 = sand.u32 %s118, 1
        %s509 = smul.addr %s508, 4
        %s510 = scalar_lea.vmem [#allocation8], %s509
        // Predicated region
        $region45: #{tpu_custom_call.1} parent=31 // pred_check
          %p511 = pneg %p128
        $region46: #{tpu_custom_call.1} parent=31 // pred_check_branch
          %513 = sbr.rel (%p511) target = $region48
        $region47: #{tpu_custom_call.1} parent=31 // pred_region
          %s515 = ssub.s32 64, 64
          %516 = vsyncadd %s507, %s515
          %s517 = sadd.s32 %s25, %s26
          %s518 = smul.addr %s517, 64
          %s519 = scalar_lea.hbm %s3, %s518
          %s521 = sshll.u32 %s510, 4
          %s522 = int_to_ptr.vmem [resolvable:$true] %s521
          %524 = dma.vmem_to_hbm [thread:$0]  %s522, 64, %s519, %s507
        $region48: #{tpu_custom_call.1} parent=31 // pred_fallthru
          _
      $region32: #{tpu_custom_call.1} parent=5 // pred_fallthru
        _
      %p525 = scmp.le.s32.totalorder 2, %s16
      // Predicated region
      $region49: #{tpu_custom_call.1} parent=5 // pred_check
        %p526 = pneg %p525
      $region50: #{tpu_custom_call.1} parent=5 // pred_check_branch
        %528 = sbr.rel (%p526) target = $region52
      $region51: #{tpu_custom_call.1} parent=5 // pred_region
        %s529 = ssub.s32 %s16, 2
        // Predicated region
        $region53: #{tpu_custom_call.1} parent=51 // pred_check
          %p530 = pneg %p134
        $region54: #{tpu_custom_call.1} parent=51 // pred_check_branch
          %532 = sbr.rel (%p530) target = $region56
        $region55: #{tpu_custom_call.1} parent=51 // pred_region
          %s533 = sand.u32 %s119, 1
          %s534 = scalar_lea.sflag [#allocation4], %s533
          %s535 = sand.u32 %s119, 1
          %s536 = smul.addr %s535, 4
          %s537 = scalar_lea.vmem [#allocation8], %s536
          %538 = dma.done %s534, 64
        $region56: #{tpu_custom_call.1} parent=51 // pred_fallthru
          _
      $region52: #{tpu_custom_call.1} parent=5 // pred_fallthru
        _
    $region6: #{tpu_custom_call.1} parent=1 // loop_footer
      %s20 = sadd.s32 1, %s16
    $region7: #{tpu_custom_call.1} parent=1 // loop_footer_branch
      %15 = sbr.rel target = $region3
    $region8: #{tpu_custom_call.1} parent=1 // loop_exit
      _
    %539 = vsyncpa [#allocation3], 1
    %s540 = scalar_lea.sflag [#allocation3], 1
    %541 = vsyncpa %s540, 1
    %542 = vsyncpa [#allocation6], 1
    %s543 = scalar_lea.sflag [#allocation6], 1
    %544 = vsyncpa %s543, 1
    %545 = vsyncpa [#allocation4], 1
    %s546 = scalar_lea.sflag [#allocation4], 1
    %547 = vsyncpa %s546, 1

</llo_original>
